<compile_context>
chip_gen: v6e
topology: v6e:2x2x1
jax: 0.10.0
libtpu: 0.0.40
codegen_flags: <defaults>
</compile_context>

<pallas_src>
import functools
import math

import jax
import jax.numpy as jnp
from jax.experimental import pallas as pl
from jax.experimental.pallas import tpu as pltpu

LRELU_SLOPE = 0.1


def _round_up(x, m):
    return ((x + m - 1) // m) * m


def get_padding(kernel_size, dilation=1):
    return (kernel_size * dilation - dilation) // 2


# ----------------------------------------------------------------------------
# Pallas kernel: tiled matmul + bias + fused activation (none / lrelu / tanh)
# ----------------------------------------------------------------------------
def _mm_bias_act_kernel(a_ref, b_ref, bias_ref, o_ref, acc_ref, *, act):
    @pl.when(pl.program_id(2) == 0)
    def _init():
        acc_ref[...] = jnp.zeros_like(acc_ref)

    acc_ref[...] += jnp.dot(a_ref[...], b_ref[...],
                            preferred_element_type=jnp.float32)

    @pl.when(pl.program_id(2) == pl.num_programs(2) - 1)
    def _finalize():
        out = acc_ref[...] + bias_ref[...]
        if act == "lrelu":
            out = jnp.where(out >= 0.0, out, out * LRELU_SLOPE)
        elif act == "tanh":
            out = jnp.tanh(out)
        o_ref[...] = out.astype(o_ref.dtype)


@functools.partial(jax.jit, static_argnames=("act",))
def matmul_bias_act(a, b, bias, *, act):
    """out = act(a @ b + bias).

    a    : (M, Kdim)       f32 activation patches (cast to bf16 here)
    b    : (K_pad, N_pad)  bf16, padded weight matrix (prepared once at init)
    bias : (1, N_pad)      f32, padded (prepared once at init)
    returns (M, N_pad) f32
    """
    M, Kdim = a.shape
    K_pad, N_pad = b.shape

    # Tile sizes. K_pad / N_pad were padded at init so these always divide.
    tm = min(256, _round_up(M, 16))       # bf16-friendly sublane multiple
    M_pad = _round_up(M, tm)
    tk = min(1024, K_pad)
    tn = min(256, N_pad)                  # matches 256x256 MXU on v6e/v7x

    a_p = jnp.pad(a, ((0, M_pad - M), (0, K_pad - Kdim))).astype(jnp.bfloat16)

    grid = (M_pad // tm, N_pad // tn, K_pad // tk)

    out = pl.pallas_call(
        functools.partial(_mm_bias_act_kernel, act=act),
        out_shape=jax.ShapeDtypeStruct((M_pad, N_pad), jnp.float32),
        grid_spec=pltpu.PrefetchScalarGridSpec(
            num_scalar_prefetch=0,
            grid=grid,
            in_specs=[
                pl.BlockSpec((tm, tk), lambda i, j, k: (i, k)),
                pl.BlockSpec((tk, tn), lambda i, j, k: (k, j)),
                pl.BlockSpec((1, tn), lambda i, j, k: (0, j)),
            ],
            out_specs=pl.BlockSpec((tm, tn), lambda i, j, k: (i, j)),
            scratch_shapes=[pltpu.VMEM((tm, tn), jnp.float32)],
        ),
        compiler_params=pltpu.CompilerParams(
            dimension_semantics=("parallel", "parallel", "arbitrary")),
    )(a_p, b, bias)

    return out[:M]


# ----------------------------------------------------------------------------
# im2col glue (stride-1 correlation windows) — plain JAX, channel-last layout
# ----------------------------------------------------------------------------
def _im2col(x, K, dilation, pad):
    # x: (B, T, C) -> (B*T_out, K*C)
    B, T, C = x.shape
    T_out = T + 2 * pad - dilation * (K - 1)
    xp = jnp.pad(x, ((0, 0), (pad, pad), (0, 0)))
    if K == 1:
        return xp.reshape(B * T_out, C), T_out
    cols = [xp[:, k * dilation:k * dilation + T_out, :] for k in range(K)]
    patches = jnp.stack(cols, axis=2)          # (B, T_out, K, C)
    return patches.reshape(B * T_out, K * C), T_out


def conv1d_forward(x, layer, act="none"):
    # x: (B, T, Cin) channel-last
    B = x.shape[0]
    a, T_out = _im2col(x, layer["K"], layer["dilation"], layer["pad"])
    out = matmul_bias_act(a, layer["wmat"], layer["bias"], act=act)
    return out[:, :layer["Cout"]].reshape(B, T_out, layer["Cout"])


def conv_transpose1d_forward(x, layer, act="none"):
    # Zero-stuff by the stride, then a stride-1 conv with the flipped kernel.
    B, T, C = x.shape
    u, K, p = layer["stride"], layer["K"], layer["pad"]
    T_dil = (T - 1) * u + 1
    x_dil = jnp.zeros((B, T_dil, C), x.dtype).at[:, ::u, :].set(x)
    a, T_out = _im2col(x_dil, K, 1, K - 1 - p)
    out = matmul_bias_act(a, layer["wmat"], layer["bias"], act=act)
    return out[:, :layer["Cout"]].reshape(B, T_out, layer["Cout"])


# ----------------------------------------------------------------------------
# Weight preparation (hoisted out of the forward path; done once at init)
# ----------------------------------------------------------------------------
def _finish_prepare(wmat, b, **meta):
    Kdim, Cout = wmat.shape
    tk = min(1024, _round_up(Kdim, 128))
    K_pad = _round_up(Kdim, tk)
    tn = min(256, _round_up(Cout, 128))
    N_pad = _round_up(Cout, tn)
    wmat_p = jnp.pad(wmat, ((0, K_pad - Kdim), (0, N_pad - Cout))).astype(jnp.bfloat16)
    bias_p = jnp.pad(b.reshape(1, Cout), ((0, 0), (0, N_pad - Cout))).astype(jnp.float32)
    return dict(wmat=wmat_p, bias=bias_p, Cout=Cout, **meta)


def prepare_conv1d(w, b, dilation, pad):
    # PyTorch Conv1d weight: (Cout, Cin, K)
    Cout, Cin, K = w.shape
    wmat = jnp.transpose(w, (2, 1, 0)).reshape(K * Cin, Cout)   # [k*Cin+ci, co]
    return _finish_prepare(wmat, b, K=K, dilation=dilation, pad=pad, stride=1)


def prepare_conv_transpose1d(w, b, stride, pad):
    # PyTorch ConvTranspose1d weight: (Cin, Cout, K); flip taps + swap io.
    Cin, Cout, K = w.shape
    wmat = jnp.transpose(w[:, :, ::-1], (2, 0, 1)).reshape(K * Cin, Cout)
    return _finish_prepare(wmat, b, K=K, dilation=1, pad=pad, stride=stride)


# ----------------------------------------------------------------------------
# ResBlocks / Generator forward
# ----------------------------------------------------------------------------
def resblock1_forward(x, rb):
    for c1, c2 in zip(rb["convs1"], rb["convs2"]):
        xt = jnp.where(x >= 0.0, x, x * LRELU_SLOPE)
        xt = conv1d_forward(xt, c1, act="lrelu")   # inner leaky fused in kernel
        xt = conv1d_forward(xt, c2, act="none")
        x = xt + x
    return x


def resblock2_forward(x, rb):
    for c in rb["convs"]:
        xt = jnp.where(x >= 0.0, x, x * LRELU_SLOPE)
        xt = conv1d_forward(xt, c, act="none")
        x = xt + x
    return x


def generator_forward(x, params):
    """x: (B, 80, T) f32 -> (B, 1, T * prod(upsample_rates)) f32."""
    cfg = params["cfg"]
    num_kernels = cfg["num_kernels"]

    x = jnp.transpose(x, (0, 2, 1))                          # (B, T, C) channel-last
    x = conv1d_forward(x, params["conv_pre"], act="lrelu")   # fuses first leaky_relu

    for i in range(cfg["num_upsamples"]):
        if i > 0:
            x = jnp.where(x >= 0.0, x, x * LRELU_SLOPE)
        x = conv_transpose1d_forward(x, params["ups"][i], act="none")
        xs = None
        for j in range(num_kernels):
            rb = params["resblocks"][i * num_kernels + j]
            r = (resblock1_forward(x, rb) if cfg["resblock"] == "1"
                 else resblock2_forward(x, rb))
            xs = r if xs is None else xs + r
        x = xs / num_kernels

    x = jnp.where(x >= 0.0, x, x * 0.01)    # F.leaky_relu default slope (0.01)
    x = conv1d_forward(x, params["conv_post"], act="tanh")   # tanh fused in kernel
    return jnp.transpose(x, (0, 2, 1))      # back to PyTorch (B, 1, T_out)


# ----------------------------------------------------------------------------
# Deterministic parameter init (weight_norm at init == plain weight)
# ----------------------------------------------------------------------------
def _rand_conv1d(key, cout, cin, k, std):
    key, kw, kb = jax.random.split(key, 3)
    w = jax.random.normal(kw, (cout, cin, k), jnp.float32) * std
    b = jax.random.normal(kb, (cout,), jnp.float32) * 0.01
    return key, w, b


def _rand_conv_transpose1d(key, cin, cout, k, std):
    key, kw, kb = jax.random.split(key, 3)
    w = jax.random.normal(kw, (cin, cout, k), jnp.float32) * std
    b = jax.random.normal(kb, (cout,), jnp.float32) * 0.01
    return key, w, b


def init_resblock1_params(key, channels, kernel_size, dilations):
    convs1, convs2 = [], []
    for d in dilations:
        key, w, b = _rand_conv1d(key, channels, channels, kernel_size, std=0.01)
        convs1.append(prepare_conv1d(w, b, dilation=d, pad=get_padding(kernel_size, d)))
    for _ in dilations:
        key, w, b = _rand_conv1d(key, channels, channels, kernel_size, std=0.01)
        convs2.append(prepare_conv1d(w, b, dilation=1, pad=get_padding(kernel_size, 1)))
    return {"convs1": convs1, "convs2": convs2}, key


def init_resblock2_params(key, channels, kernel_size, dilations):
    convs = []
    for d in dilations[:2]:
        key, w, b = _rand_conv1d(key, channels, channels, kernel_size, std=0.01)
        convs.append(prepare_conv1d(w, b, dilation=d, pad=get_padding(kernel_size, d)))
    return {"convs": convs}, key


def init_generator_params(key, cfg):
    C0 = cfg["upsample_initial_channel"]
    num_kernels = len(cfg["resblock_kernel_sizes"])
    num_upsamples = len(cfg["upsample_rates"])

    key, w, b = _rand_conv1d(key, C0, 80, 7, std=1.0 / math.sqrt(80 * 7))
    conv_pre = prepare_conv1d(w, b, dilation=1, pad=3)

    ups = []
    for i, (u, k) in enumerate(zip(cfg["upsample_rates"], cfg["upsample_kernel_sizes"])):
        cin = C0 // (2 ** i)
        cout = C0 // (2 ** (i + 1))
        key, w, b = _rand_conv_transpose1d(key, cin, cout, k, std=0.01)
        ups.append(prepare_conv_transpose1d(w, b, stride=u, pad=(k - u) // 2))

    resblocks = []
    for i in range(num_upsamples):
        ch = C0 // (2 ** (i + 1))
        for k, d in zip(cfg["resblock_kernel_sizes"], cfg["resblock_dilation_sizes"]):
            if cfg["resblock"] == "1":
                rb, key = init_resblock1_params(key, ch, k, d)
            else:
                rb, key = init_resblock2_params(key, ch, k, d)
            resblocks.append(rb)

    ch = C0 // (2 ** num_upsamples)
    key, w, b = _rand_conv1d(key, 1, ch, 7, std=0.01)
    conv_post = prepare_conv1d(w, b, dilation=1, pad=3)

    params = {
        "conv_pre": conv_pre,
        "ups": ups,
        "resblocks": resblocks,
        "conv_post": conv_post,
        "cfg": dict(cfg, num_kernels=num_kernels, num_upsamples=num_upsamples),
    }
    return params, key


# ----------------------------------------------------------------------------
if __name__ == "__main__":
    cfg = dict(
        resblock="1",
        upsample_rates=(2, 2),
        upsample_kernel_sizes=(4, 4),
        upsample_initial_channel=32,
        resblock_kernel_sizes=(3, 7),
        resblock_dilation_sizes=((1, 3, 5), (1, 3, 5)),
    )

    key = jax.random.PRNGKey(0)
    params, key = init_generator_params(key, cfg)

    B, C_MEL, T = 2, 80, 8          # small mel-spectrogram-like input
    key, kx = jax.random.split(key)
    x = jax.random.normal(kx, (B, C_MEL, T), jnp.float32)

    y = generator_forward(x, params)
    jax.block_until_ready(y)

    t_out = T
    for u in cfg["upsample_rates"]:
        t_out *= u
    assert y.shape == (B, 1, t_out), y.shape
    assert bool(jnp.all(jnp.isfinite(y))), "non-finite output"

    print("KERNEL_OK")
</pallas_src>

<mosaic_0001>
module attributes {stable_mosaic.version = 11 : i64} {
  func.func @_mm_bias_act_kernel(%arg0: i32, %arg1: i32, %arg2: i32, %arg3: memref<16x640xbf16, #tpu.memory_space<vmem>>, %arg4: memref<640x128xbf16, #tpu.memory_space<vmem>>, %arg5: memref<1x128xf32, #tpu.memory_space<vmem>>, %arg6: memref<16x128xf32, #tpu.memory_space<vmem>>, %arg7: memref<16x128xf32, #tpu.memory_space<vmem>>) attributes {dimension_semantics = [#tpu.dimension_semantics<parallel>, #tpu.dimension_semantics<parallel>, #tpu.dimension_semantics<arbitrary>], iteration_bounds = array<i64: 1, 1, 1>, scalar_prefetch = 0 : i64, scratch_operands = 1 : i64, tpu.core_type = #tpu.core_type<tc>, window_params = [{transform_indices = @transform_0, window_bounds = array<i64: 16, 640>}, {transform_indices = @transform_1, window_bounds = array<i64: 640, 128>}, {transform_indices = @transform_2, window_bounds = array<i64: 1, 128>}, {transform_indices = @transform_3, window_bounds = array<i64: 16, 128>}]} {
    %c0_i32 = arith.constant 0 : i32
    %0 = arith.cmpi eq, %arg2, %c0_i32 : i32
    %1 = arith.extui %0 : i1 to i32
    %c0_i32_0 = arith.constant 0 : i32
    %2 = arith.cmpi ne, %1, %c0_i32_0 : i32
    scf.if %2 {
      %cst_10 = arith.constant 0.000000e+00 : f32
      %12 = vector.broadcast %cst_10 : f32 to vector<16x128xf32>
      %c0_11 = arith.constant 0 : index
      %c0_12 = arith.constant 0 : index
      %13 = vector.load %arg7[%c0_11, %c0_12] : memref<16x128xf32, #tpu.memory_space<vmem>>, vector<16x128xf32>
      tpu.vector_store %arg7[%c0_11, %c0_12], %12 {strides = array<i32>} : memref<16x128xf32, #tpu.memory_space<vmem>>, vector<16x128xf32>,
    } else {
    }
    %c0 = arith.constant 0 : index
    %c0_1 = arith.constant 0 : index
    %3 = vector.load %arg7[%c0, %c0_1] : memref<16x128xf32, #tpu.memory_space<vmem>>, vector<16x128xf32>
    %c0_2 = arith.constant 0 : index
    %c0_3 = arith.constant 0 : index
    %4 = vector.load %arg3[%c0_2, %c0_3] : memref<16x640xbf16, #tpu.memory_space<vmem>>, vector<16x640xbf16>
    %c0_4 = arith.constant 0 : index
    %c0_5 = arith.constant 0 : index
    %5 = vector.load %arg4[%c0_4, %c0_5] : memref<640x128xbf16, #tpu.memory_space<vmem>>, vector<640x128xbf16>
    %cst = arith.constant dense<0.000000e+00> : vector<16x128xf32>
    %6 = tpu.matmul %4, %5, %cst {dimension_numbers = #tpu.dot_dimension_numbers<[1], [0], [0], [1], [0, 0, 1, 1], [], []>} : vector<16x640xbf16>, vector<640x128xbf16>, vector<16x128xf32> -> vector<16x128xf32>
    %7 = arith.addf %3, %6 : vector<16x128xf32>
    %c0_6 = arith.constant 0 : index
    %c0_7 = arith.constant 0 : index
    %8 = vector.load %arg7[%c0_6, %c0_7] : memref<16x128xf32, #tpu.memory_space<vmem>>, vector<16x128xf32>
    tpu.vector_store %arg7[%c0_6, %c0_7], %7 {strides = array<i32>} : memref<16x128xf32, #tpu.memory_space<vmem>>, vector<16x128xf32>,
    %c0_i32_8 = arith.constant 0 : i32
    %9 = arith.cmpi eq, %arg2, %c0_i32_8 : i32
    %10 = arith.extui %9 : i1 to i32
    %c0_i32_9 = arith.constant 0 : i32
    %11 = arith.cmpi ne, %10, %c0_i32_9 : i32
    scf.if %11 {
      %c0_10 = arith.constant 0 : index
      %c0_11 = arith.constant 0 : index
      %12 = vector.load %arg7[%c0_10, %c0_11] : memref<16x128xf32, #tpu.memory_space<vmem>>, vector<16x128xf32>
      %c0_12 = arith.constant 0 : index
      %c0_13 = arith.constant 0 : index
      %13 = vector.load %arg5[%c0_12, %c0_13] : memref<1x128xf32, #tpu.memory_space<vmem>>, vector<1x128xf32>
      %14 = vector.broadcast %13 : vector<1x128xf32> to vector<16x128xf32>
      %15 = arith.addf %12, %14 : vector<16x128xf32>
      %cst_14 = arith.constant 0.000000e+00 : f32
      %16 = vector.broadcast %cst_14 : f32 to vector<16x128xf32>
      %17 = arith.cmpf oge, %15, %16 : vector<16x128xf32>
      %cst_15 = arith.constant 1.000000e-01 : f32
      %18 = vector.broadcast %cst_15 : f32 to vector<16x128xf32>
      %19 = arith.mulf %15, %18 : vector<16x128xf32>
      %20 = arith.select %17, %15, %19 : vector<16x128xi1>, vector<16x128xf32>
      %c0_16 = arith.constant 0 : index
      %c0_17 = arith.constant 0 : index
      %21 = vector.load %arg6[%c0_16, %c0_17] : memref<16x128xf32, #tpu.memory_space<vmem>>, vector<16x128xf32>
      tpu.vector_store %arg6[%c0_16, %c0_17], %20 {strides = array<i32>} : memref<16x128xf32, #tpu.memory_space<vmem>>, vector<16x128xf32>,
    } else {
    }
    return
  }
  func.func @transform_0(%arg0: i32, %arg1: i32, %arg2: i32) -> (i32, i32) {
    %c0_i32 = arith.constant 0 : i32
    return %arg0, %arg2 : i32, i32
  }
  func.func @transform_1(%arg0: i32, %arg1: i32, %arg2: i32) -> (i32, i32) {
    %c0_i32 = arith.constant 0 : i32
    return %arg2, %arg1 : i32, i32
  }
  func.func @transform_2(%arg0: i32, %arg1: i32, %arg2: i32) -> (i32, i32) {
    %c0_i32 = arith.constant 0 : i32
    %c0_i32_0 = arith.constant 0 : i32
    return %c0_i32, %arg1 : i32, i32
  }
  func.func @transform_3(%arg0: i32, %arg1: i32, %arg2: i32) -> (i32, i32) {
    %c0_i32 = arith.constant 0 : i32
    return %arg0, %arg1 : i32, i32
  }
}

</mosaic_0001>

<llo_original>
// kernel: matmul_bias_act.1
$region0: #{matmul_bias_act.1}
  #allocation0 [shape = 'u32[]', space=smem, size = 0x4, offset = 0x4, fixed_abs, tag = 'smem constant byte address 0x4 - core index']
  #allocation1 [shape = 'u32[144,128]{1,0:T(1,128)}', space=vmem, size = 0x12000, scoped, tag = 'internal scratch']
  #allocation2 [shape = 'f32[16,128]{1,0:T(8,128)}', space=vmem, size = 0x2000, scoped, tag = 'scratch operand']
  %s0 = inlined_call_operand.vmem [shape: bf16[16,640], index: 0, kind: input, shape index: {}]
  %s1 = inlined_call_operand.hbm [shape: bf16[640,128], index: 1, kind: input, shape index: {}]
  %s2 = inlined_call_operand.vmem [shape: f32[1,128], index: 2, kind: input, shape index: {}]
  %s3 = inlined_call_operand.hbm [shape: f32[16,128], index: 3, kind: output, shape index: {}]
  %s4 = sld [smem:[#allocation0]]
  $region34: #{matmul_bias_act.1} parent=0
    _
  %s6 = ssub.s32 1, %s4
  %s7 = scalar_select 0, %s6, %s4
  $region1: #{matmul_bias_act.1} parent=0
    #allocation3 [shape = 'u8[163840]{0}', space=vmem, size = 0x28000, scoped, tag = 'input window, operand 1, single buffered']
    #allocation4 [shape = 's32[1]{0}', space=sflag, size = 0x4, scoped, tag = 'scoped memory for matmul_bias_act.1']
    #allocation5 [shape = 's32[1]{0}', space=sflag, size = 0x4, scoped, tag = 'scoped memory for matmul_bias_act.1']
    #allocation6 [shape = 'u8[8192]{0}', space=vmem, size = 0x2000, scoped, tag = 'output window, operand 0, single buffered']
    %8 = vsyncpa [#allocation4], 0
    %9 = vsyncpa [#allocation5], 0
    // Predicated region
    $region2: #{matmul_bias_act.1} parent=1 // pred_check
      _
    $region3: #{matmul_bias_act.1} parent=1 // pred_check_branch
      %11 = sbr.rel (0) target = $region5
    $region4: #{matmul_bias_act.1} parent=1 // pred_region
      _
    $region5: #{matmul_bias_act.1} parent=1 // pred_fallthru
      _
    // Predicated region
    $region6: #{matmul_bias_act.1} parent=1 // pred_check
      _
    $region7: #{matmul_bias_act.1} parent=1 // pred_check_branch
      %13 = sbr.rel (0) target = $region9
    $region8: #{matmul_bias_act.1} parent=1 // pred_region
      %s15 = ssub.s32 5120, 5120
      %16 = vsyncadd [#allocation4], %s15
      %s17 = sshll.u32 [#allocation3], 4
      %s18 = int_to_ptr.vmem [resolvable:$true] %s17
      %23 = dma.hbm_to_vmem [thread:$0]  %s1, 5120, %s18, [#allocation4], 64, 64, 4
    $region9: #{matmul_bias_act.1} parent=1 // pred_fallthru
      _
    // Predicated region
    $region10: #{matmul_bias_act.1} parent=1 // pred_check
      _
    $region11: #{matmul_bias_act.1} parent=1 // pred_check_branch
      %25 = sbr.rel (0) target = $region13
    $region12: #{matmul_bias_act.1} parent=1 // pred_region
      _
    $region13: #{matmul_bias_act.1} parent=1 // pred_fallthru
      _
    // Predicated region
    $region14: #{matmul_bias_act.1} parent=1 // pred_check
      _
    $region15: #{matmul_bias_act.1} parent=1 // pred_check_branch
      %27 = sbr.rel (0) target = $region17
    $region16: #{matmul_bias_act.1} parent=1 // pred_region
      %28 = dma.done [#allocation4], 5120
    $region17: #{matmul_bias_act.1} parent=1 // pred_fallthru
      _
    %p30 = scmp.eq.s32.totalorder 0, 0
    // Predicated region
    $region18: #{matmul_bias_act.1} parent=1 // pred_check
      %p31 = pneg %p30
    $region19: #{matmul_bias_act.1} parent=1 // pred_check_branch
      %33 = sbr.rel (%p31) target = $region21
    $region20: #{matmul_bias_act.1} parent=1 // pred_region
      %34 = vst [vmem:[#allocation2] sm:$0xff] 0.0
      %35 = vst [vmem:[#allocation2 + $0x8] sm:$0xff] 0.0
    $region21: #{matmul_bias_act.1} parent=1 // pred_fallthru
      _
    %v36 = vld [vmem:[#allocation2] sm:$0xff]
    %v37 = vld [vmem:[#allocation2 + $0x8] sm:$0xff]
    %v38 = vld [vmem:[%s0] sm:$0xff]
    %v39 = vld [vmem:[%s0 + $0x8] sm:$0xff]
    %v40 = vld [vmem:[%s0 + $0x10] sm:$0xf]
    %v41 = vld [vmem:[%s0 + $0x14] sm:$0xff]
    %v42 = vld [vmem:[%s0 + $0x1c] sm:$0xff]
    %v43 = vld [vmem:[%s0 + $0x24] sm:$0xf]
    %v44 = vld [vmem:[#allocation3] sm:$0xf]
    %v45 = vld [vmem:[#allocation3 + $0x4] sm:$0xf]
    %v46 = vld [vmem:[#allocation3 + $0x8] sm:$0xf]
    %v47 = vld [vmem:[#allocation3 + $0xc] sm:$0xf]
    %v48 = vld [vmem:[#allocation3 + $0x10] sm:$0xf]
    %v49 = vld [vmem:[#allocation3 + $0x14] sm:$0xf]
    %v50 = vld [vmem:[#allocation3 + $0x18] sm:$0xf]
    %v51 = vld [vmem:[#allocation3 + $0x1c] sm:$0xf]
    %v52 = vld [vmem:[#allocation3 + $0x20] sm:$0xf]
    %v53 = vld [vmem:[#allocation3 + $0x24] sm:$0xf]
    %v54 = vld [vmem:[#allocation3 + $0x28] sm:$0xf]
    %v55 = vld [vmem:[#allocation3 + $0x2c] sm:$0xf]
    %v56 = vld [vmem:[#allocation3 + $0x30] sm:$0xf]
    %v57 = vld [vmem:[#allocation3 + $0x34] sm:$0xf]
    %v58 = vld [vmem:[#allocation3 + $0x38] sm:$0xf]
    %v59 = vld [vmem:[#allocation3 + $0x3c] sm:$0xf]
    %v60 = vld [vmem:[#allocation3 + $0x40] sm:$0xf]
    %v61 = vld [vmem:[#allocation3 + $0x44] sm:$0xf]
    %v62 = vld [vmem:[#allocation3 + $0x48] sm:$0xf]
    %v63 = vld [vmem:[#allocation3 + $0x4c] sm:$0xf]
    %v64 = vld [vmem:[#allocation3 + $0x50] sm:$0xf]
    %v65 = vld [vmem:[#allocation3 + $0x54] sm:$0xf]
    %v66 = vld [vmem:[#allocation3 + $0x58] sm:$0xf]
    %v67 = vld [vmem:[#allocation3 + $0x5c] sm:$0xf]
    %v68 = vld [vmem:[#allocation3 + $0x60] sm:$0xf]
    %v69 = vld [vmem:[#allocation3 + $0x64] sm:$0xf]
    %v70 = vld [vmem:[#allocation3 + $0x68] sm:$0xf]
    %v71 = vld [vmem:[#allocation3 + $0x6c] sm:$0xf]
    %v72 = vld [vmem:[#allocation3 + $0x70] sm:$0xf]
    %v73 = vld [vmem:[#allocation3 + $0x74] sm:$0xf]
    %v74 = vld [vmem:[#allocation3 + $0x78] sm:$0xf]
    %v75 = vld [vmem:[#allocation3 + $0x7c] sm:$0xf]
    %v76 = vld [vmem:[#allocation3 + $0x80] sm:$0xf]
    %v77 = vld [vmem:[#allocation3 + $0x84] sm:$0xf]
    %v78 = vld [vmem:[#allocation3 + $0x88] sm:$0xf]
    %v79 = vld [vmem:[#allocation3 + $0x8c] sm:$0xf]
    %v80 = vld [vmem:[#allocation3 + $0x90] sm:$0xf]
    %v81 = vld [vmem:[#allocation3 + $0x94] sm:$0xf]
    %v82 = vld [vmem:[#allocation3 + $0x98] sm:$0xf]
    %v83 = vld [vmem:[#allocation3 + $0x9c] sm:$0xf]
    %v84 = vld [vmem:[#allocation3 + $0xa0] sm:$0xf]
    %v85 = vld [vmem:[#allocation3 + $0xa4] sm:$0xf]
    %v86 = vld [vmem:[#allocation3 + $0xa8] sm:$0xf]
    %v87 = vld [vmem:[#allocation3 + $0xac] sm:$0xf]
    %v88 = vld [vmem:[#allocation3 + $0xb0] sm:$0xf]
    %v89 = vld [vmem:[#allocation3 + $0xb4] sm:$0xf]
    %v90 = vld [vmem:[#allocation3 + $0xb8] sm:$0xf]
    %v91 = vld [vmem:[#allocation3 + $0xbc] sm:$0xf]
    %v92 = vld [vmem:[#allocation3 + $0xc0] sm:$0xf]
    %v93 = vld [vmem:[#allocation3 + $0xc4] sm:$0xf]
    %v94 = vld [vmem:[#allocation3 + $0xc8] sm:$0xf]
    %v95 = vld [vmem:[#allocation3 + $0xcc] sm:$0xf]
    %v96 = vld [vmem:[#allocation3 + $0xd0] sm:$0xf]
    %v97 = vld [vmem:[#allocation3 + $0xd4] sm:$0xf]
    %v98 = vld [vmem:[#allocation3 + $0xd8] sm:$0xf]
    %v99 = vld [vmem:[#allocation3 + $0xdc] sm:$0xf]
    %v100 = vld [vmem:[#allocation3 + $0xe0] sm:$0xf]
    %v101 = vld [vmem:[#allocation3 + $0xe4] sm:$0xf]
    %v102 = vld [vmem:[#allocation3 + $0xe8] sm:$0xf]
    %v103 = vld [vmem:[#allocation3 + $0xec] sm:$0xf]
    %v104 = vld [vmem:[#allocation3 + $0xf0] sm:$0xf]
    %v105 = vld [vmem:[#allocation3 + $0xf4] sm:$0xf]
    %v106 = vld [vmem:[#allocation3 + $0xf8] sm:$0xf]
    %v107 = vld [vmem:[#allocation3 + $0xfc] sm:$0xf]
    %v108 = vld [vmem:[#allocation3 + $0x100] sm:$0xf]
    %v109 = vld [vmem:[#allocation3 + $0x104] sm:$0xf]
    %v110 = vld [vmem:[#allocation3 + $0x108] sm:$0xf]
    %v111 = vld [vmem:[#allocation3 + $0x10c] sm:$0xf]
    %v112 = vld [vmem:[#allocation3 + $0x110] sm:$0xf]
    %v113 = vld [vmem:[#allocation3 + $0x114] sm:$0xf]
    %v114 = vld [vmem:[#allocation3 + $0x118] sm:$0xf]
    %v115 = vld [vmem:[#allocation3 + $0x11c] sm:$0xf]
    %v116 = vld [vmem:[#allocation3 + $0x120] sm:$0xf]
    %v117 = vld [vmem:[#allocation3 + $0x124] sm:$0xf]
    %v118 = vld [vmem:[#allocation3 + $0x128] sm:$0xf]
    %v119 = vld [vmem:[#allocation3 + $0x12c] sm:$0xf]
    %v120 = vld [vmem:[#allocation3 + $0x130] sm:$0xf]
    %v121 = vld [vmem:[#allocation3 + $0x134] sm:$0xf]
    %v122 = vld [vmem:[#allocation3 + $0x138] sm:$0xf]
    %v123 = vld [vmem:[#allocation3 + $0x13c] sm:$0xf]
    %v130 = vunpack.c.l.b16 %v38
    %v131 = vunpack.c.h.b16 %v38
    %v132 = vunpack.c.l.b16 %v39
    %v133 = vunpack.c.h.b16 %v39
    %v134 = vunpack.c.l.b16 %v40
    %v135 = vunpack.c.l.b16 %v41
    %v136 = vunpack.c.h.b16 %v41
    %v137 = vunpack.c.l.b16 %v42
    %v138 = vunpack.c.h.b16 %v42
    %v139 = vunpack.c.l.b16 %v43
    %v140 = vpack.c.b16 %v135, %v130
    %v141 = vpack.c.b16 %v136, %v131
    %v142 = vpack.c.b16 %v137, %v132
    %v143 = vpack.c.b16 %v138, %v133
    %v144 = vpack.c.b16 %v139, %v134
    %v230 = vunpack.c.l.b16 %v44
    %v231 = vunpack.c.l.b16 %v45
    %v232 = vunpack.c.l.b16 %v46
    %v233 = vunpack.c.l.b16 %v47
    %v234 = vunpack.c.l.b16 %v48
    %v235 = vunpack.c.l.b16 %v49
    %v236 = vunpack.c.l.b16 %v50
    %v237 = vunpack.c.l.b16 %v51
    %v238 = vunpack.c.l.b16 %v52
    %v239 = vunpack.c.l.b16 %v53
    %v240 = vunpack.c.l.b16 %v54
    %v241 = vunpack.c.l.b16 %v55
    %v242 = vunpack.c.l.b16 %v56
    %v243 = vunpack.c.l.b16 %v57
    %v244 = vunpack.c.l.b16 %v58
    %v245 = vunpack.c.l.b16 %v59
    %v246 = vunpack.c.l.b16 %v60
    %v247 = vunpack.c.l.b16 %v61
    %v248 = vunpack.c.l.b16 %v62
    %v249 = vunpack.c.l.b16 %v63
    %v250 = vunpack.c.l.b16 %v64
    %v251 = vunpack.c.l.b16 %v65
    %v252 = vunpack.c.l.b16 %v66
    %v253 = vunpack.c.l.b16 %v67
    %v254 = vunpack.c.l.b16 %v68
    %v255 = vunpack.c.l.b16 %v69
    %v256 = vunpack.c.l.b16 %v70
    %v257 = vunpack.c.l.b16 %v71
    %v258 = vunpack.c.l.b16 %v72
    %v259 = vunpack.c.l.b16 %v73
    %v260 = vunpack.c.l.b16 %v74
    %v261 = vunpack.c.l.b16 %v75
    %v262 = vunpack.c.l.b16 %v76
    %v263 = vunpack.c.l.b16 %v77
    %v264 = vunpack.c.l.b16 %v78
    %v265 = vunpack.c.l.b16 %v79
    %v266 = vunpack.c.l.b16 %v80
    %v267 = vunpack.c.l.b16 %v81
    %v268 = vunpack.c.l.b16 %v82
    %v269 = vunpack.c.l.b16 %v83
    %v270 = vunpack.c.l.b16 %v84
    %v271 = vunpack.c.l.b16 %v85
    %v272 = vunpack.c.l.b16 %v86
    %v273 = vunpack.c.l.b16 %v87
    %v274 = vunpack.c.l.b16 %v88
    %v275 = vunpack.c.l.b16 %v89
    %v276 = vunpack.c.l.b16 %v90
    %v277 = vunpack.c.l.b16 %v91
    %v278 = vunpack.c.l.b16 %v92
    %v279 = vunpack.c.l.b16 %v93
    %v280 = vunpack.c.l.b16 %v94
    %v281 = vunpack.c.l.b16 %v95
    %v282 = vunpack.c.l.b16 %v96
    %v283 = vunpack.c.l.b16 %v97
    %v284 = vunpack.c.l.b16 %v98
    %v285 = vunpack.c.l.b16 %v99
    %v286 = vunpack.c.l.b16 %v100
    %v287 = vunpack.c.l.b16 %v101
    %v288 = vunpack.c.l.b16 %v102
    %v289 = vunpack.c.l.b16 %v103
    %v290 = vunpack.c.l.b16 %v104
    %v291 = vunpack.c.l.b16 %v105
    %v292 = vunpack.c.l.b16 %v106
    %v293 = vunpack.c.l.b16 %v107
    %v294 = vunpack.c.l.b16 %v108
    %v295 = vunpack.c.l.b16 %v109
    %v296 = vunpack.c.l.b16 %v110
    %v297 = vunpack.c.l.b16 %v111
    %v298 = vunpack.c.l.b16 %v112
    %v299 = vunpack.c.l.b16 %v113
    %v300 = vunpack.c.l.b16 %v114
    %v301 = vunpack.c.l.b16 %v115
    %v302 = vunpack.c.l.b16 %v116
    %v303 = vunpack.c.l.b16 %v117
    %v304 = vunpack.c.l.b16 %v118
    %v305 = vunpack.c.l.b16 %v119
    %v306 = vunpack.c.l.b16 %v120
    %v307 = vunpack.c.l.b16 %v121
    %v308 = vunpack.c.l.b16 %v122
    %v309 = vunpack.c.l.b16 %v123
    %v310 = vpack.c.b16 %v231, %v230
    %v311 = vpack.c.b16 %v233, %v232
    %v312 = vpack.c.b16 %v235, %v234
    %v313 = vpack.c.b16 %v237, %v236
    %v314 = vpack.c.b16 %v239, %v238
    %v315 = vpack.c.b16 %v241, %v240
    %v316 = vpack.c.b16 %v243, %v242
    %v317 = vpack.c.b16 %v245, %v244
    %v318 = vpack.c.b16 %v247, %v246
    %v319 = vpack.c.b16 %v249, %v248
    %v320 = vpack.c.b16 %v251, %v250
    %v321 = vpack.c.b16 %v253, %v252
    %v322 = vpack.c.b16 %v255, %v254
    %v323 = vpack.c.b16 %v257, %v256
    %v324 = vpack.c.b16 %v259, %v258
    %v325 = vpack.c.b16 %v261, %v260
    %v326 = vpack.c.b16 %v263, %v262
    %v327 = vpack.c.b16 %v265, %v264
    %v328 = vpack.c.b16 %v267, %v266
    %v329 = vpack.c.b16 %v269, %v268
    %v330 = vpack.c.b16 %v271, %v270
    %v331 = vpack.c.b16 %v273, %v272
    %v332 = vpack.c.b16 %v275, %v274
    %v333 = vpack.c.b16 %v277, %v276
    %v334 = vpack.c.b16 %v279, %v278
    %v335 = vpack.c.b16 %v281, %v280
    %v336 = vpack.c.b16 %v283, %v282
    %v337 = vpack.c.b16 %v285, %v284
    %v338 = vpack.c.b16 %v287, %v286
    %v339 = vpack.c.b16 %v289, %v288
    %v340 = vpack.c.b16 %v291, %v290
    %v341 = vpack.c.b16 %v293, %v292
    %v342 = vpack.c.b16 %v295, %v294
    %v343 = vpack.c.b16 %v297, %v296
    %v344 = vpack.c.b16 %v299, %v298
    %v345 = vpack.c.b16 %v301, %v300
    %v346 = vpack.c.b16 %v303, %v302
    %v347 = vpack.c.b16 %v305, %v304
    %v348 = vpack.c.b16 %v307, %v306
    %v349 = vpack.c.b16 %v309, %v308
    %390 = vmatprep.subr.bf16.mxu0 0
    %391 = vmatpush1.bf16.msra.mxu0 %v317
    %392 = vmatprep.subr.bf16.mxu0 0
    %393 = vmatpush1.bf16.msra.mxu0 %v316
    %394 = vmatprep.subr.bf16.mxu0 0
    %395 = vmatpush1.bf16.msra.mxu0 %v315
    %396 = vmatprep.subr.bf16.mxu0 0
    %397 = vmatpush1.bf16.msra.mxu0 %v314
    %398 = vmatprep.subr.bf16.mxu0 0
    %399 = vmatpush1.bf16.msra.mxu0 %v313
    %400 = vmatprep.subr.bf16.mxu0 0
    %401 = vmatpush1.bf16.msra.mxu0 %v312
    %402 = vmatprep.subr.bf16.mxu0 0
    %403 = vmatpush1.bf16.msra.mxu0 %v311
    %404 = vmatprep.subr.bf16.mxu0 0
    %405 = vmatpush1.bf16.msra.mxu0 %v310
    %406 = vmatprep.subr.bf16.mxu0 0
    %407 = vmatpush2.bf16.msra.mxu0 %v325
    %408 = vmatprep.subr.bf16.mxu0 0
    %409 = vmatpush2.bf16.msra.mxu0 %v324
    %410 = vmatprep.subr.bf16.mxu0 0
    %411 = vmatpush2.bf16.msra.mxu0 %v323
    %412 = vmatprep.subr.bf16.mxu0 0
    %413 = vmatpush2.bf16.msra.mxu0 %v322
    %414 = vmatprep.subr.bf16.mxu0 0
    %415 = vmatpush2.bf16.msra.mxu0 %v321
    %416 = vmatprep.subr.bf16.mxu0 0
    %417 = vmatpush2.bf16.msra.mxu0 %v320
    %418 = vmatprep.subr.bf16.mxu0 0
    %419 = vmatpush2.bf16.msra.mxu0 %v319
    %420 = vmatprep.subr.bf16.mxu0 0
    %421 = vmatpush2.bf16.msra.mxu0 %v318
    %422 = vmatprep.mubr.bf16.mxu0 %v141
    %423 = vmatmul.mubr.bf16.gmra.mxu0 %v140
    %v424 = vpop.f32.mrf.mxu0
    %v425 = vadd.f32 0.0, %v424
    %v426 = vpop.f32.mrf.mxu0
    %v427 = vpop.f32.mrf.mxu0
    %v428 = vadd.f32 0.0, %v427
    %v429 = vpop.f32.mrf.mxu0
    %430 = vdwg.mxu0
    %431 = vmatprep.subr.bf16.mxu0 0
    %432 = vmatpush1.bf16.msra.mxu0 %v333
    %433 = vmatprep.subr.bf16.mxu0 0
    %434 = vmatpush1.bf16.msra.mxu0 %v332
    %435 = vmatprep.subr.bf16.mxu0 0
    %436 = vmatpush1.bf16.msra.mxu0 %v331
    %437 = vmatprep.subr.bf16.mxu0 0
    %438 = vmatpush1.bf16.msra.mxu0 %v330
    %439 = vmatprep.subr.bf16.mxu0 0
    %440 = vmatpush1.bf16.msra.mxu0 %v329
    %441 = vmatprep.subr.bf16.mxu0 0
    %442 = vmatpush1.bf16.msra.mxu0 %v328
    %443 = vmatprep.subr.bf16.mxu0 0
    %444 = vmatpush1.bf16.msra.mxu0 %v327
    %445 = vmatprep.subr.bf16.mxu0 0
    %446 = vmatpush1.bf16.msra.mxu0 %v326
    %447 = vmatprep.subr.bf16.mxu0 0
    %448 = vmatpush2.bf16.msra.mxu0 %v341
    %449 = vmatprep.subr.bf16.mxu0 0
    %450 = vmatpush2.bf16.msra.mxu0 %v340
    %451 = vmatprep.subr.bf16.mxu0 0
    %452 = vmatpush2.bf16.msra.mxu0 %v339
    %453 = vmatprep.subr.bf16.mxu0 0
    %454 = vmatpush2.bf16.msra.mxu0 %v338
    %455 = vmatprep.subr.bf16.mxu0 0
    %456 = vmatpush2.bf16.msra.mxu0 %v337
    %457 = vmatprep.subr.bf16.mxu0 0
    %458 = vmatpush2.bf16.msra.mxu0 %v336
    %459 = vmatprep.subr.bf16.mxu0 0
    %460 = vmatpush2.bf16.msra.mxu0 %v335
    %461 = vmatprep.subr.bf16.mxu0 0
    %462 = vmatpush2.bf16.msra.mxu0 %v334
    %463 = vmatprep.mubr.bf16.mxu0 %v143
    %464 = vmatmul.mubr.bf16.gmra.mxu0 %v142
    %v465 = vpop.f32.mrf.mxu0
    %v466 = vadd.f32 %v425, %v465
    %v467 = vpop.f32.mrf.mxu0
    %v468 = vpop.f32.mrf.mxu0
    %v469 = vadd.f32 %v428, %v468
    %v470 = vpop.f32.mrf.mxu0
    %471 = vdwg.mxu0
    %472 = vmatprep.subr.bf16.mxu0 0
    %473 = vmatpush1.bf16.msra.mxu0 %v349
    %474 = vmatprep.subr.bf16.mxu0 0
    %475 = vmatpush1.bf16.msra.mxu0 %v348
    %476 = vmatprep.subr.bf16.mxu0 0
    %477 = vmatpush1.bf16.msra.mxu0 %v347
    %478 = vmatprep.subr.bf16.mxu0 0
    %479 = vmatpush1.bf16.msra.mxu0 %v346
    %480 = vmatprep.subr.bf16.mxu0 0
    %481 = vmatpush1.bf16.msra.mxu0 %v345
    %482 = vmatprep.subr.bf16.mxu0 0
    %483 = vmatpush1.bf16.msra.mxu0 %v344
    %484 = vmatprep.subr.bf16.mxu0 0
    %485 = vmatpush1.bf16.msra.mxu0 %v343
    %486 = vmatprep.subr.bf16.mxu0 0
    %487 = vmatpush1.bf16.msra.mxu0 %v342
    %488 = vmatprep.subr.bf16.mxu0 0
    %489 = vmatpush2.bf16.msra.mxu0 0
    %490 = vmatprep.subr.bf16.mxu0 0
    %491 = vmatpush2.bf16.msra.mxu0 0
    %492 = vmatprep.subr.bf16.mxu0 0
    %493 = vmatpush2.bf16.msra.mxu0 0
    %494 = vmatprep.subr.bf16.mxu0 0
    %495 = vmatpush2.bf16.msra.mxu0 0
    %496 = vmatprep.subr.bf16.mxu0 0
    %497 = vmatpush2.bf16.msra.mxu0 0
    %498 = vmatprep.subr.bf16.mxu0 0
    %499 = vmatpush2.bf16.msra.mxu0 0
    %500 = vmatprep.subr.bf16.mxu0 0
    %501 = vmatpush2.bf16.msra.mxu0 0
    %502 = vmatprep.subr.bf16.mxu0 0
    %503 = vmatpush2.bf16.msra.mxu0 0
    %504 = vmatprep.mubr.bf16.mxu0 0
    %505 = vmatmul.mubr.bf16.gmra.mxu0 %v144
    %v506 = vpop.f32.mrf.mxu0
    %v507 = vadd.f32 %v466, %v506
    %v508 = vpop.f32.mrf.mxu0
    %v509 = vpop.f32.mrf.mxu0
    %v510 = vadd.f32 %v469, %v509
    %v511 = vpop.f32.mrf.mxu0
    %512 = vdwg.mxu0
    %v513 = vadd.f32 %v36, %v507
    %v514 = vadd.f32 %v37, %v510
    %515 = vst [vmem:[#allocation2] sm:$0xff] %v513
    %516 = vst [vmem:[#allocation2 + $0x8] sm:$0xff] %v514
    // Predicated region
    $region22: #{matmul_bias_act.1} parent=1 // pred_check
      %p517 = pneg %p30
    $region23: #{matmul_bias_act.1} parent=1 // pred_check_branch
      %519 = sbr.rel (%p517) target = $region25
    $region24: #{matmul_bias_act.1} parent=1 // pred_region
      %v520 = vld [vmem:[#allocation2] sm:$0xff]
      %v521 = vld [vmem:[#allocation2 + $0x8] sm:$0xff]
      %v522 = vld [vmem:[%s2] sm:$0x1]
      %v524 = vlaneseq
      %v525 = vshrl.u32 %v524, 7
      %v526 = vsub.s32 0, %v525
      %v527 = vrot.slane %v522, %v526
      %v529 = vadd.f32 %v520, %v527
      %v530 = vadd.f32 %v521, %v527
      %vm531 = vcmp.ge.f32.partialorder %v529, 0.0
      %vm532 = vcmp.ge.f32.partialorder %v530, 0.0
      %v533 = vmul.f32 %v529, 0.1
      %v534 = vmul.f32 %v530, 0.1
      %v535 = vsel %vm531, %v529, %v533
      %v536 = vsel %vm532, %v530, %v534
      %537 = vst [vmem:[#allocation6] sm:$0xff] %v535
      %538 = vst [vmem:[#allocation6 + $0x8] sm:$0xff] %v536
    $region25: #{matmul_bias_act.1} parent=1 // pred_fallthru
      _
    // Predicated region
    $region26: #{matmul_bias_act.1} parent=1 // pred_check
      _
    $region27: #{matmul_bias_act.1} parent=1 // pred_check_branch
      %540 = sbr.rel (0) target = $region29
    $region28: #{matmul_bias_act.1} parent=1 // pred_region
      %s542 = ssub.s32 256, 256
      %543 = vsyncadd [#allocation5], %s542
      %s544 = sshll.u32 [#allocation6], 4
      %s545 = int_to_ptr.vmem [resolvable:$true] %s544
      %550 = dma.vmem_to_hbm [thread:$0]  %s545, 256, %s3, [#allocation5], 128, 128, 8
    $region29: #{matmul_bias_act.1} parent=1 // pred_fallthru
      _
    // Predicated region
    $region30: #{matmul_bias_act.1} parent=1 // pred_check
      _
    $region31: #{matmul_bias_act.1} parent=1 // pred_check_branch
      %552 = sbr.rel (0) target = $region33
    $region32: #{matmul_bias_act.1} parent=1 // pred_region
      %553 = dma.done [#allocation5], 256
    $region33: #{matmul_bias_act.1} parent=1 // pred_fallthru
      _
    %554 = vsyncpa [#allocation4], 1
    %555 = vsyncpa [#allocation5], 1

</llo_original>
